<compile_context>
chip_gen: v6e
topology: v6e:2x2x1
jax: 0.10.0
libtpu: 0.0.40
codegen_flags: <defaults>
</compile_context>

<pallas_src>
import math

import jax
import jax.numpy as jnp
from jax.experimental import pallas as pl
from jax.experimental.pallas import tpu as pltpu

# Model hyper-parameters (small, consistent with a transformer EncoderLayer)
BATCH   = 2
SEQ     = 8
D_MODEL = 32
N_HEADS = 4
D_K     = D_MODEL // N_HEADS
D_FF    = 64
EPS     = 1e-6          # LayerNorm eps (added to std, matching the PyTorch code)
BS      = BATCH * SEQ   # flattened token count


def encoder_layer_kernel(x_ref, wqkv_ref, wo_ref, w1_ref, w2_ref, pb_ref,
                         mask_ref, out_ref, heads_ref):
    x  = x_ref[...]                     # (BS, D) fp32, whole batch flattened
    pb = pb_ref[...]                    # (4, 3D) packed small parameters (f32)

    # unpack the consolidated small parameters (static lane slices)
    bqkv  = pb[0:1, :]                                   # (1, 3D)  (bq pre-scaled)
    ln1_g = pb[1:2, 0:D_MODEL]
    ln1_b = pb[1:2, D_MODEL:2 * D_MODEL]
    bo    = pb[1:2, 2 * D_MODEL:3 * D_MODEL]
    ln2_g = pb[2:3, 0:D_MODEL]
    ln2_b = pb[2:3, D_MODEL:2 * D_MODEL]
    b2    = pb[2:3, 2 * D_MODEL:3 * D_MODEL]
    b1    = pb[3:4, 0:D_FF]

    def layer_norm(v, g, b):
        # PyTorch: a_2 * (x - mean) / (std + eps) + b_2, std unbiased (ddof=1)
        mean = jnp.mean(v, axis=-1, keepdims=True)
        var  = jnp.sum((v - mean) ** 2, axis=-1, keepdims=True) * (1.0 / (D_MODEL - 1))
        inv  = pl.reciprocal(jnp.sqrt(var) + EPS, approx=True)   # EUP slot
        return g * (v - mean) * inv + b

    # ---- sublayer 0: self-attention --------------------------------------
    y = layer_norm(x, ln1_g, ln1_b)

    # fused QKV projection: one (BS, D) @ (D, 3D) bf16 MXU push, f32 accumulate
    qkv = jnp.dot(y.astype(jnp.bfloat16), wqkv_ref[...],
                  preferred_element_type=jnp.float32) + bqkv       # (BS, 3D) f32

    mask = mask_ref[...]                                           # (BS, BS) f32

    # Q is already scaled by 1/sqrt(d_k) (folded into Wq / bq at pack time).
    q  = qkv[:, 0:D_MODEL].astype(jnp.bfloat16)                    # (BS, D)
    kT = qkv[:, D_MODEL:2 * D_MODEL].T.astype(jnp.bfloat16)        # (D, BS), 1 transpose
    v  = qkv[:, 2 * D_MODEL:3 * D_MODEL].astype(jnp.bfloat16)      # (BS, D)

    for h in range(N_HEADS):                       # static unroll over heads
        lo = h * D_K
        s = jnp.dot(q[:, lo:lo + D_K], kT[lo:lo + D_K, :],
                    preferred_element_type=jnp.float32) + mask     # (BS, BS)
        s = s - jnp.max(s, axis=-1, keepdims=True)
        p = jnp.exp(s)
        p = p * pl.reciprocal(jnp.sum(p, axis=-1, keepdims=True), approx=True)
        # park this head's output at its static lane offset (no head concat)
        heads_ref[:, lo:lo + D_K] = jnp.dot(p.astype(jnp.bfloat16), v[:, lo:lo + D_K],
                                            preferred_element_type=jnp.float32)

    # single Wo matmul for all heads: (BS, D) @ (D, D)
    attn = jnp.dot(heads_ref[...].astype(jnp.bfloat16), wo_ref[...],
                   preferred_element_type=jnp.float32)

    # TODO(synk): nn.Dropout is identity here (inference / p=0); no stochastic path.
    x1 = x + attn + bo

    # ---- sublayer 1: position-wise feed-forward ---------------------------
    y2 = layer_norm(x1, ln2_g, ln2_b)
    h1 = jnp.maximum(
        jnp.dot(y2.astype(jnp.bfloat16), w1_ref[...],
                preferred_element_type=jnp.float32) + b1, 0.0)
    ff = jnp.dot(h1.astype(jnp.bfloat16), w2_ref[...],
                 preferred_element_type=jnp.float32) + b2

    out_ref[...] = x1 + ff


def prepare_params(params):
    """One-time parameter packing.  Runs OUTSIDE the per-call forward path:
    fuses Wq/Wk/Wv, folds the 1/sqrt(d_k) softmax scale into Wq/bq, packs all
    small vectors into a single (4, 3D) slab, precomputes the block-diagonal
    attention mask and casts matmul weights to bf16 (MXU-native)."""
    (ln1_g, ln1_b, wq, bq, wk, bk, wv, bv, wo, bo,
     ln2_g, ln2_b, w1, b1, w2, b2) = params

    scale = 1.0 / math.sqrt(D_K)
    wqkv = jnp.concatenate([wq * scale, wk, wv], axis=1).astype(jnp.bfloat16)  # (D, 3D)
    row0 = jnp.concatenate([bq * scale, bk, bv], axis=1)                       # (1, 3D)
    row1 = jnp.concatenate([ln1_g, ln1_b, bo], axis=1)                         # (1, 3D)
    row2 = jnp.concatenate([ln2_g, ln2_b, b2], axis=1)                         # (1, 3D)
    row3 = jnp.concatenate([b1, jnp.zeros((1, 3 * D_MODEL - D_FF), jnp.float32)], axis=1)
    pb = jnp.concatenate([row0, row1, row2, row3], axis=0)                     # (4, 3D) f32

    # block-diagonal additive mask: tokens only attend within their own batch
    rb = jax.lax.broadcasted_iota(jnp.int32, (BS, BS), 0) // SEQ
    cb = jax.lax.broadcasted_iota(jnp.int32, (BS, BS), 1) // SEQ
    mask = jnp.where(rb == cb, 0.0, -1e30).astype(jnp.float32)                 # (BS, BS)

    return (wqkv,
            wo.astype(jnp.bfloat16),
            w1.astype(jnp.bfloat16),
            w2.astype(jnp.bfloat16),
            pb,
            mask)


@jax.jit
def encoder_layer_fwd(x, packed):
    """Hot path: no repacking, just reshape + one pallas_call."""
    wqkv, wo, w1, w2, pb, mask = packed
    B, S, D = x.shape
    bs = B * S

    vmem = pl.BlockSpec(memory_space=pltpu.MemorySpace.VMEM)
    out_flat = pl.pallas_call(
        encoder_layer_kernel,
        out_shape=jax.ShapeDtypeStruct((bs, D), jnp.float32),
        in_specs=[vmem] * 7,
        out_specs=vmem,
        scratch_shapes=[pltpu.VMEM((bs, D_MODEL), jnp.float32)],   # head-concat scratch
    )(x.reshape(bs, D), wqkv, wo, w1, w2, pb, mask)
    return out_flat.reshape(B, S, D)


def reference(x, params):
    """Pure-JAX f32 reference mirroring the PyTorch EncoderLayer forward."""
    (ln1_g, ln1_b, wq, bq, wk, bk, wv, bv, wo, bo,
     ln2_g, ln2_b, w1, b1, w2, b2) = params

    def layer_norm(v, g, b):
        mean = jnp.mean(v, axis=-1, keepdims=True)
        var = jnp.sum((v - mean) ** 2, axis=-1, keepdims=True) / (v.shape[-1] - 1)
        return g[0] * (v - mean) / (jnp.sqrt(var) + EPS) + b[0]

    def attn_block(y):
        q = y @ wq + bq[0]
        k = y @ wk + bk[0]
        v = y @ wv + bv[0]
        B, S, _ = y.shape
        q = q.reshape(B, S, N_HEADS, D_K).transpose(0, 2, 1, 3)
        k = k.reshape(B, S, N_HEADS, D_K).transpose(0, 2, 1, 3)
        v = v.reshape(B, S, N_HEADS, D_K).transpose(0, 2, 1, 3)
        scores = jnp.einsum("bhqd,bhkd->bhqk", q, k) / jnp.sqrt(jnp.float32(D_K))
        p = jax.nn.softmax(scores, axis=-1)
        o = jnp.einsum("bhqk,bhkd->bhqd", p, v)
        o = o.transpose(0, 2, 1, 3).reshape(B, S, D_MODEL)
        return o @ wo + bo[0]

    x1 = x + attn_block(layer_norm(x, ln1_g, ln1_b))
    y2 = layer_norm(x1, ln2_g, ln2_b)
    ff = jnp.maximum(y2 @ w1 + b1[0], 0.0) @ w2 + b2[0]
    return x1 + ff


def make_params(key):
    ks = jax.random.split(key, 8)
    scale = 0.1
    wq = scale * jax.random.normal(ks[0], (D_MODEL, D_MODEL), jnp.float32)
    wk = scale * jax.random.normal(ks[1], (D_MODEL, D_MODEL), jnp.float32)
    wv = scale * jax.random.normal(ks[2], (D_MODEL, D_MODEL), jnp.float32)
    wo = scale * jax.random.normal(ks[3], (D_MODEL, D_MODEL), jnp.float32)
    w1 = scale * jax.random.normal(ks[4], (D_MODEL, D_FF), jnp.float32)
    w2 = scale * jax.random.normal(ks[5], (D_FF, D_MODEL), jnp.float32)
    bq = 0.01 * jax.random.normal(ks[6], (1, D_MODEL), jnp.float32)
    bk = jnp.zeros((1, D_MODEL), jnp.float32)
    bv = jnp.zeros((1, D_MODEL), jnp.float32)
    bo = jnp.zeros((1, D_MODEL), jnp.float32)
    b1 = 0.01 * jax.random.normal(ks[7], (1, D_FF), jnp.float32)
    b2 = jnp.zeros((1, D_MODEL), jnp.float32)
    ln1_g = jnp.ones((1, D_MODEL), jnp.float32)
    ln1_b = jnp.zeros((1, D_MODEL), jnp.float32)
    ln2_g = jnp.ones((1, D_MODEL), jnp.float32)
    ln2_b = jnp.zeros((1, D_MODEL), jnp.float32)
    return (ln1_g, ln1_b, wq, bq, wk, bk, wv, bv, wo, bo,
            ln2_g, ln2_b, w1, b1, w2, b2)


if __name__ == "__main__":
    key = jax.random.PRNGKey(0)
    kx, kp = jax.random.split(key)
    x = jax.random.normal(kx, (BATCH, SEQ, D_MODEL), jnp.float32)
    params = make_params(kp)

    # one-time packing (not on the per-call forward path)
    packed = jax.block_until_ready(prepare_params(params))

    out = encoder_layer_fwd(x, packed)
    out = jax.block_until_ready(out)

    ref = reference(x, params)
    assert out.shape == (BATCH, SEQ, D_MODEL)
    # tolerance accounts for bf16 MXU operands and approx (EUP) reciprocals;
    # the math (unbiased std, eps-on-std, bias/residual ordering) matches PyTorch.
    err = jnp.max(jnp.abs(out - ref))
    assert jnp.allclose(out, ref, atol=2e-2, rtol=1e-2), f"max err {err}"
    print("KERNEL_OK")
</pallas_src>

<mosaic_0001>
module attributes {stable_mosaic.version = 11 : i64} {
  func.func @encoder_layer_kernel(%arg0: memref<16x32xf32, #tpu.memory_space<vmem>>, %arg1: memref<32x96xbf16, #tpu.memory_space<vmem>>, %arg2: memref<32x32xbf16, #tpu.memory_space<vmem>>, %arg3: memref<32x64xbf16, #tpu.memory_space<vmem>>, %arg4: memref<64x32xbf16, #tpu.memory_space<vmem>>, %arg5: memref<4x96xf32, #tpu.memory_space<vmem>>, %arg6: memref<16x16xf32, #tpu.memory_space<vmem>>, %arg7: memref<16x32xf32, #tpu.memory_space<vmem>>, %arg8: memref<16x32xf32, #tpu.memory_space<vmem>>) attributes {dimension_semantics = [], scalar_prefetch = 0 : i64, scratch_operands = 1 : i64, tpu.core_type = #tpu.core_type<tc>} {
    %c0 = arith.constant 0 : index
    %c0_0 = arith.constant 0 : index
    %0 = vector.load %arg0[%c0, %c0_0] : memref<16x32xf32, #tpu.memory_space<vmem>>, vector<16x32xf32>
    %c0_1 = arith.constant 0 : index
    %c0_2 = arith.constant 0 : index
    %1 = vector.load %arg5[%c0_1, %c0_2] : memref<4x96xf32, #tpu.memory_space<vmem>>, vector<4x96xf32>
    %2 = vector.extract_strided_slice %1 {offsets = [0, 0], sizes = [1, 96], strides = [1, 1]} : vector<4x96xf32> to vector<1x96xf32>
    %3 = vector.extract_strided_slice %1 {offsets = [1, 0], sizes = [1, 32], strides = [1, 1]} : vector<4x96xf32> to vector<1x32xf32>
    %4 = vector.extract_strided_slice %1 {offsets = [1, 32], sizes = [1, 32], strides = [1, 1]} : vector<4x96xf32> to vector<1x32xf32>
    %5 = vector.extract_strided_slice %1 {offsets = [1, 64], sizes = [1, 32], strides = [1, 1]} : vector<4x96xf32> to vector<1x32xf32>
    %6 = vector.extract_strided_slice %1 {offsets = [2, 0], sizes = [1, 32], strides = [1, 1]} : vector<4x96xf32> to vector<1x32xf32>
    %7 = vector.extract_strided_slice %1 {offsets = [2, 32], sizes = [1, 32], strides = [1, 1]} : vector<4x96xf32> to vector<1x32xf32>
    %8 = vector.extract_strided_slice %1 {offsets = [2, 64], sizes = [1, 32], strides = [1, 1]} : vector<4x96xf32> to vector<1x32xf32>
    %9 = vector.extract_strided_slice %1 {offsets = [3, 0], sizes = [1, 64], strides = [1, 1]} : vector<4x96xf32> to vector<1x64xf32>
    %cst = arith.constant dense<0.000000e+00> : vector<16xf32>
    %10 = vector.multi_reduction <add>, %0, %cst [1] : vector<16x32xf32> to vector<16xf32>
    %11 = vector.shape_cast %10 : vector<16xf32> to vector<16x1xf32>
    %cst_3 = arith.constant 3.200000e+01 : f32
    %12 = vector.broadcast %cst_3 : f32 to vector<16x1xf32>
    %13 = arith.divf %11, %12 : vector<16x1xf32>
    %14 = vector.broadcast %13 : vector<16x1xf32> to vector<16x32xf32>
    %15 = arith.subf %0, %14 : vector<16x32xf32>
    %16 = arith.mulf %15, %15 : vector<16x32xf32>
    %cst_4 = arith.constant dense<0.000000e+00> : vector<16xf32>
    %17 = vector.multi_reduction <add>, %16, %cst_4 [1] : vector<16x32xf32> to vector<16xf32>
    %18 = vector.shape_cast %17 : vector<16xf32> to vector<16x1xf32>
    %cst_5 = arith.constant 0.0322580636 : f32
    %19 = vector.broadcast %cst_5 : f32 to vector<16x1xf32>
    %20 = arith.mulf %18, %19 : vector<16x1xf32>
    %21 = math.sqrt %20 : vector<16x1xf32>
    %cst_6 = arith.constant 9.99999997E-7 : f32
    %22 = vector.broadcast %cst_6 : f32 to vector<16x1xf32>
    %23 = arith.addf %21, %22 : vector<16x1xf32>
    %24 = tpu.reciprocal %23 {approx = true} : vector<16x1xf32> -> vector<16x1xf32>
    %25 = vector.broadcast %13 : vector<16x1xf32> to vector<16x32xf32>
    %26 = arith.subf %0, %25 : vector<16x32xf32>
    %27 = vector.broadcast %3 : vector<1x32xf32> to vector<16x32xf32>
    %28 = arith.mulf %27, %26 : vector<16x32xf32>
    %29 = vector.broadcast %24 : vector<16x1xf32> to vector<16x32xf32>
    %30 = arith.mulf %28, %29 : vector<16x32xf32>
    %31 = vector.broadcast %4 : vector<1x32xf32> to vector<16x32xf32>
    %32 = arith.addf %30, %31 : vector<16x32xf32>
    %33 = arith.truncf %32 : vector<16x32xf32> to vector<16x32xbf16>
    %c0_7 = arith.constant 0 : index
    %c0_8 = arith.constant 0 : index
    %34 = vector.load %arg1[%c0_7, %c0_8] : memref<32x96xbf16, #tpu.memory_space<vmem>>, vector<32x96xbf16>
    %cst_9 = arith.constant dense<0.000000e+00> : vector<16x96xf32>
    %35 = tpu.matmul %33, %34, %cst_9 {dimension_numbers = #tpu.dot_dimension_numbers<[1], [0], [0], [1], [0, 0, 1, 1], [], []>} : vector<16x32xbf16>, vector<32x96xbf16>, vector<16x96xf32> -> vector<16x96xf32>
    %36 = vector.broadcast %2 : vector<1x96xf32> to vector<16x96xf32>
    %37 = arith.addf %35, %36 : vector<16x96xf32>
    %c0_10 = arith.constant 0 : index
    %c0_11 = arith.constant 0 : index
    %38 = vector.load %arg6[%c0_10, %c0_11] : memref<16x16xf32, #tpu.memory_space<vmem>>, vector<16x16xf32>
    %39 = vector.extract_strided_slice %37 {offsets = [0, 0], sizes = [16, 32], strides = [1, 1]} : vector<16x96xf32> to vector<16x32xf32>
    %40 = arith.truncf %39 : vector<16x32xf32> to vector<16x32xbf16>
    %41 = vector.extract_strided_slice %37 {offsets = [0, 32], sizes = [16, 32], strides = [1, 1]} : vector<16x96xf32> to vector<16x32xf32>
    %42 = tpu.transpose %41, [1, 0] : vector<16x32xf32> -> vector<32x16xf32>
    %43 = arith.truncf %42 : vector<32x16xf32> to vector<32x16xbf16>
    %44 = vector.extract_strided_slice %37 {offsets = [0, 64], sizes = [16, 32], strides = [1, 1]} : vector<16x96xf32> to vector<16x32xf32>
    %45 = arith.truncf %44 : vector<16x32xf32> to vector<16x32xbf16>
    %46 = vector.extract_strided_slice %40 {offsets = [0, 0], sizes = [16, 8], strides = [1, 1]} : vector<16x32xbf16> to vector<16x8xbf16>
    %47 = vector.extract_strided_slice %43 {offsets = [0, 0], sizes = [8, 16], strides = [1, 1]} : vector<32x16xbf16> to vector<8x16xbf16>
    %cst_12 = arith.constant dense<0.000000e+00> : vector<16x16xf32>
    %48 = tpu.matmul %46, %47, %cst_12 {dimension_numbers = #tpu.dot_dimension_numbers<[1], [0], [0], [1], [0, 0, 1, 1], [], []>} : vector<16x8xbf16>, vector<8x16xbf16>, vector<16x16xf32> -> vector<16x16xf32>
    %49 = arith.addf %48, %38 : vector<16x16xf32>
    %cst_13 = arith.constant dense<0xFF800000> : vector<16xf32>
    %50 = vector.multi_reduction <maximumf>, %49, %cst_13 [1] : vector<16x16xf32> to vector<16xf32>
    %51 = vector.shape_cast %50 : vector<16xf32> to vector<16x1xf32>
    %52 = vector.broadcast %51 : vector<16x1xf32> to vector<16x16xf32>
    %53 = arith.subf %49, %52 : vector<16x16xf32>
    %54 = math.exp %53 : vector<16x16xf32>
    %cst_14 = arith.constant dense<0.000000e+00> : vector<16xf32>
    %55 = vector.multi_reduction <add>, %54, %cst_14 [1] : vector<16x16xf32> to vector<16xf32>
    %56 = vector.shape_cast %55 : vector<16xf32> to vector<16x1xf32>
    %57 = tpu.reciprocal %56 {approx = true} : vector<16x1xf32> -> vector<16x1xf32>
    %58 = vector.broadcast %57 : vector<16x1xf32> to vector<16x16xf32>
    %59 = arith.mulf %54, %58 : vector<16x16xf32>
    %60 = arith.truncf %59 : vector<16x16xf32> to vector<16x16xbf16>
    %61 = vector.extract_strided_slice %45 {offsets = [0, 0], sizes = [16, 8], strides = [1, 1]} : vector<16x32xbf16> to vector<16x8xbf16>
    %cst_15 = arith.constant dense<0.000000e+00> : vector<16x8xf32>
    %62 = tpu.matmul %60, %61, %cst_15 {dimension_numbers = #tpu.dot_dimension_numbers<[1], [0], [0], [1], [0, 0, 1, 1], [], []>} : vector<16x16xbf16>, vector<16x8xbf16>, vector<16x8xf32> -> vector<16x8xf32>
    %c0_16 = arith.constant 0 : index
    %c0_17 = arith.constant 0 : index
    %63 = vector.load %arg8[%c0_16, %c0_17] : memref<16x32xf32, #tpu.memory_space<vmem>>, vector<16x8xf32>
    tpu.vector_store %arg8[%c0_16, %c0_17], %62 {strides = array<i32>} : memref<16x32xf32, #tpu.memory_space<vmem>>, vector<16x8xf32>,
    %64 = vector.extract_strided_slice %40 {offsets = [0, 8], sizes = [16, 8], strides = [1, 1]} : vector<16x32xbf16> to vector<16x8xbf16>
    %65 = vector.extract_strided_slice %43 {offsets = [8, 0], sizes = [8, 16], strides = [1, 1]} : vector<32x16xbf16> to vector<8x16xbf16>
    %cst_18 = arith.constant dense<0.000000e+00> : vector<16x16xf32>
    %66 = tpu.matmul %64, %65, %cst_18 {dimension_numbers = #tpu.dot_dimension_numbers<[1], [0], [0], [1], [0, 0, 1, 1], [], []>} : vector<16x8xbf16>, vector<8x16xbf16>, vector<16x16xf32> -> vector<16x16xf32>
    %67 = arith.addf %66, %38 : vector<16x16xf32>
    %cst_19 = arith.constant dense<0xFF800000> : vector<16xf32>
    %68 = vector.multi_reduction <maximumf>, %67, %cst_19 [1] : vector<16x16xf32> to vector<16xf32>
    %69 = vector.shape_cast %68 : vector<16xf32> to vector<16x1xf32>
    %70 = vector.broadcast %69 : vector<16x1xf32> to vector<16x16xf32>
    %71 = arith.subf %67, %70 : vector<16x16xf32>
    %72 = math.exp %71 : vector<16x16xf32>
    %cst_20 = arith.constant dense<0.000000e+00> : vector<16xf32>
    %73 = vector.multi_reduction <add>, %72, %cst_20 [1] : vector<16x16xf32> to vector<16xf32>
    %74 = vector.shape_cast %73 : vector<16xf32> to vector<16x1xf32>
    %75 = tpu.reciprocal %74 {approx = true} : vector<16x1xf32> -> vector<16x1xf32>
    %76 = vector.broadcast %75 : vector<16x1xf32> to vector<16x16xf32>
    %77 = arith.mulf %72, %76 : vector<16x16xf32>
    %78 = arith.truncf %77 : vector<16x16xf32> to vector<16x16xbf16>
    %79 = vector.extract_strided_slice %45 {offsets = [0, 8], sizes = [16, 8], strides = [1, 1]} : vector<16x32xbf16> to vector<16x8xbf16>
    %cst_21 = arith.constant dense<0.000000e+00> : vector<16x8xf32>
    %80 = tpu.matmul %78, %79, %cst_21 {dimension_numbers = #tpu.dot_dimension_numbers<[1], [0], [0], [1], [0, 0, 1, 1], [], []>} : vector<16x16xbf16>, vector<16x8xbf16>, vector<16x8xf32> -> vector<16x8xf32>
    %c0_22 = arith.constant 0 : index
    %c8 = arith.constant 8 : index
    %81 = vector.load %arg8[%c0_22, %c8] : memref<16x32xf32, #tpu.memory_space<vmem>>, vector<16x8xf32>
    tpu.vector_store %arg8[%c0_22, %c8], %80 {strides = array<i32>} : memref<16x32xf32, #tpu.memory_space<vmem>>, vector<16x8xf32>,
    %82 = vector.extract_strided_slice %40 {offsets = [0, 16], sizes = [16, 8], strides = [1, 1]} : vector<16x32xbf16> to vector<16x8xbf16>
    %83 = vector.extract_strided_slice %43 {offsets = [16, 0], sizes = [8, 16], strides = [1, 1]} : vector<32x16xbf16> to vector<8x16xbf16>
    %cst_23 = arith.constant dense<0.000000e+00> : vector<16x16xf32>
    %84 = tpu.matmul %82, %83, %cst_23 {dimension_numbers = #tpu.dot_dimension_numbers<[1], [0], [0], [1], [0, 0, 1, 1], [], []>} : vector<16x8xbf16>, vector<8x16xbf16>, vector<16x16xf32> -> vector<16x16xf32>
    %85 = arith.addf %84, %38 : vector<16x16xf32>
    %cst_24 = arith.constant dense<0xFF800000> : vector<16xf32>
    %86 = vector.multi_reduction <maximumf>, %85, %cst_24 [1] : vector<16x16xf32> to vector<16xf32>
    %87 = vector.shape_cast %86 : vector<16xf32> to vector<16x1xf32>
    %88 = vector.broadcast %87 : vector<16x1xf32> to vector<16x16xf32>
    %89 = arith.subf %85, %88 : vector<16x16xf32>
    %90 = math.exp %89 : vector<16x16xf32>
    %cst_25 = arith.constant dense<0.000000e+00> : vector<16xf32>
    %91 = vector.multi_reduction <add>, %90, %cst_25 [1] : vector<16x16xf32> to vector<16xf32>
    %92 = vector.shape_cast %91 : vector<16xf32> to vector<16x1xf32>
    %93 = tpu.reciprocal %92 {approx = true} : vector<16x1xf32> -> vector<16x1xf32>
    %94 = vector.broadcast %93 : vector<16x1xf32> to vector<16x16xf32>
    %95 = arith.mulf %90, %94 : vector<16x16xf32>
    %96 = arith.truncf %95 : vector<16x16xf32> to vector<16x16xbf16>
    %97 = vector.extract_strided_slice %45 {offsets = [0, 16], sizes = [16, 8], strides = [1, 1]} : vector<16x32xbf16> to vector<16x8xbf16>
    %cst_26 = arith.constant dense<0.000000e+00> : vector<16x8xf32>
    %98 = tpu.matmul %96, %97, %cst_26 {dimension_numbers = #tpu.dot_dimension_numbers<[1], [0], [0], [1], [0, 0, 1, 1], [], []>} : vector<16x16xbf16>, vector<16x8xbf16>, vector<16x8xf32> -> vector<16x8xf32>
    %c0_27 = arith.constant 0 : index
    %c16 = arith.constant 16 : index
    %99 = vector.load %arg8[%c0_27, %c16] : memref<16x32xf32, #tpu.memory_space<vmem>>, vector<16x8xf32>
    tpu.vector_store %arg8[%c0_27, %c16], %98 {strides = array<i32>} : memref<16x32xf32, #tpu.memory_space<vmem>>, vector<16x8xf32>,
    %100 = vector.extract_strided_slice %40 {offsets = [0, 24], sizes = [16, 8], strides = [1, 1]} : vector<16x32xbf16> to vector<16x8xbf16>
    %101 = vector.extract_strided_slice %43 {offsets = [24, 0], sizes = [8, 16], strides = [1, 1]} : vector<32x16xbf16> to vector<8x16xbf16>
    %cst_28 = arith.constant dense<0.000000e+00> : vector<16x16xf32>
    %102 = tpu.matmul %100, %101, %cst_28 {dimension_numbers = #tpu.dot_dimension_numbers<[1], [0], [0], [1], [0, 0, 1, 1], [], []>} : vector<16x8xbf16>, vector<8x16xbf16>, vector<16x16xf32> -> vector<16x16xf32>
    %103 = arith.addf %102, %38 : vector<16x16xf32>
    %cst_29 = arith.constant dense<0xFF800000> : vector<16xf32>
    %104 = vector.multi_reduction <maximumf>, %103, %cst_29 [1] : vector<16x16xf32> to vector<16xf32>
    %105 = vector.shape_cast %104 : vector<16xf32> to vector<16x1xf32>
    %106 = vector.broadcast %105 : vector<16x1xf32> to vector<16x16xf32>
    %107 = arith.subf %103, %106 : vector<16x16xf32>
    %108 = math.exp %107 : vector<16x16xf32>
    %cst_30 = arith.constant dense<0.000000e+00> : vector<16xf32>
    %109 = vector.multi_reduction <add>, %108, %cst_30 [1] : vector<16x16xf32> to vector<16xf32>
    %110 = vector.shape_cast %109 : vector<16xf32> to vector<16x1xf32>
    %111 = tpu.reciprocal %110 {approx = true} : vector<16x1xf32> -> vector<16x1xf32>
    %112 = vector.broadcast %111 : vector<16x1xf32> to vector<16x16xf32>
    %113 = arith.mulf %108, %112 : vector<16x16xf32>
    %114 = arith.truncf %113 : vector<16x16xf32> to vector<16x16xbf16>
    %115 = vector.extract_strided_slice %45 {offsets = [0, 24], sizes = [16, 8], strides = [1, 1]} : vector<16x32xbf16> to vector<16x8xbf16>
    %cst_31 = arith.constant dense<0.000000e+00> : vector<16x8xf32>
    %116 = tpu.matmul %114, %115, %cst_31 {dimension_numbers = #tpu.dot_dimension_numbers<[1], [0], [0], [1], [0, 0, 1, 1], [], []>} : vector<16x16xbf16>, vector<16x8xbf16>, vector<16x8xf32> -> vector<16x8xf32>
    %c0_32 = arith.constant 0 : index
    %c24 = arith.constant 24 : index
    %117 = vector.load %arg8[%c0_32, %c24] : memref<16x32xf32, #tpu.memory_space<vmem>>, vector<16x8xf32>
    tpu.vector_store %arg8[%c0_32, %c24], %116 {strides = array<i32>} : memref<16x32xf32, #tpu.memory_space<vmem>>, vector<16x8xf32>,
    %c0_33 = arith.constant 0 : index
    %c0_34 = arith.constant 0 : index
    %118 = vector.load %arg8[%c0_33, %c0_34] : memref<16x32xf32, #tpu.memory_space<vmem>>, vector<16x32xf32>
    %119 = arith.truncf %118 : vector<16x32xf32> to vector<16x32xbf16>
    %c0_35 = arith.constant 0 : index
    %c0_36 = arith.constant 0 : index
    %120 = vector.load %arg2[%c0_35, %c0_36] : memref<32x32xbf16, #tpu.memory_space<vmem>>, vector<32x32xbf16>
    %cst_37 = arith.constant dense<0.000000e+00> : vector<16x32xf32>
    %121 = tpu.matmul %119, %120, %cst_37 {dimension_numbers = #tpu.dot_dimension_numbers<[1], [0], [0], [1], [0, 0, 1, 1], [], []>} : vector<16x32xbf16>, vector<32x32xbf16>, vector<16x32xf32> -> vector<16x32xf32>
    %122 = arith.addf %0, %121 : vector<16x32xf32>
    %123 = vector.broadcast %5 : vector<1x32xf32> to vector<16x32xf32>
    %124 = arith.addf %122, %123 : vector<16x32xf32>
    %cst_38 = arith.constant dense<0.000000e+00> : vector<16xf32>
    %125 = vector.multi_reduction <add>, %124, %cst_38 [1] : vector<16x32xf32> to vector<16xf32>
    %126 = vector.shape_cast %125 : vector<16xf32> to vector<16x1xf32>
    %cst_39 = arith.constant 3.200000e+01 : f32
    %127 = vector.broadcast %cst_39 : f32 to vector<16x1xf32>
    %128 = arith.divf %126, %127 : vector<16x1xf32>
    %129 = vector.broadcast %128 : vector<16x1xf32> to vector<16x32xf32>
    %130 = arith.subf %124, %129 : vector<16x32xf32>
    %131 = arith.mulf %130, %130 : vector<16x32xf32>
    %cst_40 = arith.constant dense<0.000000e+00> : vector<16xf32>
    %132 = vector.multi_reduction <add>, %131, %cst_40 [1] : vector<16x32xf32> to vector<16xf32>
    %133 = vector.shape_cast %132 : vector<16xf32> to vector<16x1xf32>
    %cst_41 = arith.constant 0.0322580636 : f32
    %134 = vector.broadcast %cst_41 : f32 to vector<16x1xf32>
    %135 = arith.mulf %133, %134 : vector<16x1xf32>
    %136 = math.sqrt %135 : vector<16x1xf32>
    %cst_42 = arith.constant 9.99999997E-7 : f32
    %137 = vector.broadcast %cst_42 : f32 to vector<16x1xf32>
    %138 = arith.addf %136, %137 : vector<16x1xf32>
    %139 = tpu.reciprocal %138 {approx = true} : vector<16x1xf32> -> vector<16x1xf32>
    %140 = vector.broadcast %128 : vector<16x1xf32> to vector<16x32xf32>
    %141 = arith.subf %124, %140 : vector<16x32xf32>
    %142 = vector.broadcast %6 : vector<1x32xf32> to vector<16x32xf32>
    %143 = arith.mulf %142, %141 : vector<16x32xf32>
    %144 = vector.broadcast %139 : vector<16x1xf32> to vector<16x32xf32>
    %145 = arith.mulf %143, %144 : vector<16x32xf32>
    %146 = vector.broadcast %7 : vector<1x32xf32> to vector<16x32xf32>
    %147 = arith.addf %145, %146 : vector<16x32xf32>
    %148 = arith.truncf %147 : vector<16x32xf32> to vector<16x32xbf16>
    %c0_43 = arith.constant 0 : index
    %c0_44 = arith.constant 0 : index
    %149 = vector.load %arg3[%c0_43, %c0_44] : memref<32x64xbf16, #tpu.memory_space<vmem>>, vector<32x64xbf16>
    %cst_45 = arith.constant dense<0.000000e+00> : vector<16x64xf32>
    %150 = tpu.matmul %148, %149, %cst_45 {dimension_numbers = #tpu.dot_dimension_numbers<[1], [0], [0], [1], [0, 0, 1, 1], [], []>} : vector<16x32xbf16>, vector<32x64xbf16>, vector<16x64xf32> -> vector<16x64xf32>
    %151 = vector.broadcast %9 : vector<1x64xf32> to vector<16x64xf32>
    %152 = arith.addf %150, %151 : vector<16x64xf32>
    %cst_46 = arith.constant 0.000000e+00 : f32
    %153 = vector.broadcast %cst_46 : f32 to vector<16x64xf32>
    %154 = arith.maximumf %152, %153 : vector<16x64xf32>
    %155 = arith.truncf %154 : vector<16x64xf32> to vector<16x64xbf16>
    %c0_47 = arith.constant 0 : index
    %c0_48 = arith.constant 0 : index
    %156 = vector.load %arg4[%c0_47, %c0_48] : memref<64x32xbf16, #tpu.memory_space<vmem>>, vector<64x32xbf16>
    %cst_49 = arith.constant dense<0.000000e+00> : vector<16x32xf32>
    %157 = tpu.matmul %155, %156, %cst_49 {dimension_numbers = #tpu.dot_dimension_numbers<[1], [0], [0], [1], [0, 0, 1, 1], [], []>} : vector<16x64xbf16>, vector<64x32xbf16>, vector<16x32xf32> -> vector<16x32xf32>
    %158 = vector.broadcast %8 : vector<1x32xf32> to vector<16x32xf32>
    %159 = arith.addf %157, %158 : vector<16x32xf32>
    %160 = arith.addf %124, %159 : vector<16x32xf32>
    %c0_50 = arith.constant 0 : index
    %c0_51 = arith.constant 0 : index
    %161 = vector.load %arg7[%c0_50, %c0_51] : memref<16x32xf32, #tpu.memory_space<vmem>>, vector<16x32xf32>
    tpu.vector_store %arg7[%c0_50, %c0_51], %160 {strides = array<i32>} : memref<16x32xf32, #tpu.memory_space<vmem>>, vector<16x32xf32>,
    return
  }
}

</mosaic_0001>

<llo_original>
// kernel: encoder_layer_fwd.1
$region0: #{encoder_layer_fwd.1}
  #allocation0 [shape = 'u32[]', space=smem, size = 0x4, offset = 0x4, fixed_abs, tag = 'smem constant byte address 0x4 - core index']
  #allocation1 [shape = 'u32[144,128]{1,0:T(1,128)}', space=vmem, size = 0x12000, scoped, tag = 'internal scratch']
  #allocation2 [shape = 'f32[16,32]{1,0:T(8,128)}', space=vmem, size = 0x2000, scoped, tag = 'scratch operand']
  %s0 = inlined_call_operand.vmem [shape: f32[16,32], index: 0, kind: input, shape index: {}]
  %s1 = inlined_call_operand.vmem [shape: bf16[32,96], index: 1, kind: input, shape index: {}]
  %s2 = inlined_call_operand.vmem [shape: bf16[32,32], index: 2, kind: input, shape index: {}]
  %s3 = inlined_call_operand.hbm [shape: bf16[32,64], index: 3, kind: input, shape index: {}]
  %s4 = inlined_call_operand.vmem [shape: bf16[64,32], index: 4, kind: input, shape index: {}]
  %s5 = inlined_call_operand.vmem [shape: f32[4,96], index: 5, kind: input, shape index: {}]
  %s6 = inlined_call_operand.hbm [shape: f32[16,16], index: 6, kind: input, shape index: {}]
  %s7 = inlined_call_operand.hbm [shape: f32[16,32], index: 7, kind: output, shape index: {}]
  %s8 = sld [smem:[#allocation0]]
  $region46: #{encoder_layer_fwd.1} parent=0
    _
  %s10 = ssub.s32 1, %s8
  %s11 = scalar_select 0, %s10, %s8
  $region1: #{encoder_layer_fwd.1} parent=0
    #allocation3 [shape = 'u8[8192]{0}', space=vmem, size = 0x2000, scoped, tag = 'input window, operand 3, single buffered']
    #allocation4 [shape = 's32[1]{0}', space=sflag, size = 0x4, scoped, tag = 'scoped memory for encoder_layer_fwd.1']
    #allocation5 [shape = 's32[1]{0}', space=sflag, size = 0x4, scoped, tag = 'scoped memory for encoder_layer_fwd.1']
    #allocation6 [shape = 'u8[8192]{0}', space=vmem, size = 0x2000, scoped, tag = 'input window, operand 6, single buffered']
    #allocation7 [shape = 's32[1]{0}', space=sflag, size = 0x4, scoped, tag = 'scoped memory for encoder_layer_fwd.1']
    #allocation8 [shape = 'u8[8192]{0}', space=vmem, size = 0x2000, scoped, tag = 'output window, operand 0, single buffered']
    %12 = vsyncpa [#allocation4], 0
    %13 = vsyncpa [#allocation7], 0
    %14 = vsyncpa [#allocation5], 0
    // Predicated region
    $region2: #{encoder_layer_fwd.1} parent=1 // pred_check
      _
    $region3: #{encoder_layer_fwd.1} parent=1 // pred_check_branch
      %16 = sbr.rel (0) target = $region5
    $region4: #{encoder_layer_fwd.1} parent=1 // pred_region
      _
    $region5: #{encoder_layer_fwd.1} parent=1 // pred_fallthru
      _
    // Predicated region
    $region6: #{encoder_layer_fwd.1} parent=1 // pred_check
      _
    $region7: #{encoder_layer_fwd.1} parent=1 // pred_check_branch
      %18 = sbr.rel (0) target = $region9
    $region8: #{encoder_layer_fwd.1} parent=1 // pred_region
      _
    $region9: #{encoder_layer_fwd.1} parent=1 // pred_fallthru
      _
    // Predicated region
    $region10: #{encoder_layer_fwd.1} parent=1 // pred_check
      _
    $region11: #{encoder_layer_fwd.1} parent=1 // pred_check_branch
      %20 = sbr.rel (0) target = $region13
    $region12: #{encoder_layer_fwd.1} parent=1 // pred_region
      _
    $region13: #{encoder_layer_fwd.1} parent=1 // pred_fallthru
      _
    // Predicated region
    $region14: #{encoder_layer_fwd.1} parent=1 // pred_check
      _
    $region15: #{encoder_layer_fwd.1} parent=1 // pred_check_branch
      %22 = sbr.rel (0) target = $region17
    $region16: #{encoder_layer_fwd.1} parent=1 // pred_region
      %s24 = ssub.s32 256, 256
      %25 = vsyncadd [#allocation4], %s24
      %s26 = sshll.u32 [#allocation3], 4
      %s27 = int_to_ptr.vmem [resolvable:$true] %s26
      %32 = dma.hbm_to_vmem [thread:$0]  %s3, 256, %s27, [#allocation4], 64, 64, 4
    $region17: #{encoder_layer_fwd.1} parent=1 // pred_fallthru
      _
    // Predicated region
    $region18: #{encoder_layer_fwd.1} parent=1 // pred_check
      _
    $region19: #{encoder_layer_fwd.1} parent=1 // pred_check_branch
      %34 = sbr.rel (0) target = $region21
    $region20: #{encoder_layer_fwd.1} parent=1 // pred_region
      _
    $region21: #{encoder_layer_fwd.1} parent=1 // pred_fallthru
      _
    // Predicated region
    $region22: #{encoder_layer_fwd.1} parent=1 // pred_check
      _
    $region23: #{encoder_layer_fwd.1} parent=1 // pred_check_branch
      %36 = sbr.rel (0) target = $region25
    $region24: #{encoder_layer_fwd.1} parent=1 // pred_region
      _
    $region25: #{encoder_layer_fwd.1} parent=1 // pred_fallthru
      _
    // Predicated region
    $region26: #{encoder_layer_fwd.1} parent=1 // pred_check
      _
    $region27: #{encoder_layer_fwd.1} parent=1 // pred_check_branch
      %38 = sbr.rel (0) target = $region29
    $region28: #{encoder_layer_fwd.1} parent=1 // pred_region
      %s40 = ssub.s32 256, 256
      %41 = vsyncadd [#allocation7], %s40
      %s42 = sshll.u32 [#allocation6], 4
      %s43 = int_to_ptr.vmem [resolvable:$true] %s42
      %48 = dma.hbm_to_vmem [thread:$0]  %s6, 256, %s43, [#allocation7], 128, 128, 8
    $region29: #{encoder_layer_fwd.1} parent=1 // pred_fallthru
      _
    // Predicated region
    $region30: #{encoder_layer_fwd.1} parent=1 // pred_check
      _
    $region31: #{encoder_layer_fwd.1} parent=1 // pred_check_branch
      %50 = sbr.rel (0) target = $region33
    $region32: #{encoder_layer_fwd.1} parent=1 // pred_region
      %51 = dma.done [#allocation4], 256
    $region33: #{encoder_layer_fwd.1} parent=1 // pred_fallthru
      _
    // Predicated region
    $region34: #{encoder_layer_fwd.1} parent=1 // pred_check
      _
    $region35: #{encoder_layer_fwd.1} parent=1 // pred_check_branch
      %53 = sbr.rel (0) target = $region37
    $region36: #{encoder_layer_fwd.1} parent=1 // pred_region
      %54 = dma.done [#allocation7], 256
    $region37: #{encoder_layer_fwd.1} parent=1 // pred_fallthru
      _
    %v56 = vld [vmem:[%s0] sm:$0xff]
    %v57 = vld [vmem:[%s0 + $0x8] sm:$0xff]
    %v58 = vld [vmem:[%s5] sm:$0xf]
    %vm59 = vcmask 261120
    %v60 = vsel %vm59, %v56, 0.0
    %61 = vadd.xlane.f32.xlu0 %v60
    %v62 = vpop.xlane.xlu0 %61
    %v63 = vsel %vm59, %v57, 0.0
    %64 = vadd.xlane.f32.xlu0 %v63
    %v65 = vpop.xlane.xlu0 %64
    %v66 = vrcp.pop 32.0
    %v67 = vmul.f32 %v62, %v66
    %v68 = vmul.f32 %v65, %v66
    %v69 = vsub.f32 %v56, %v67
    %v70 = vsub.f32 %v57, %v68
    %v71 = vmul.f32 %v69, %v69
    %v72 = vmul.f32 %v70, %v70
    %v73 = vsel %vm59, %v71, 0.0
    %74 = vadd.xlane.f32.xlu0 %v73
    %v75 = vpop.xlane.xlu0 %74
    %v76 = vsel %vm59, %v72, 0.0
    %77 = vadd.xlane.f32.xlu0 %v76
    %v78 = vpop.xlane.xlu0 %77
    %v79 = vmul.f32 %v75, 0.032258064
    %v80 = vmul.f32 %v78, 0.032258064
    %v81 = vrsqrt.pop %v79
    %v82 = vmul.f32 %v79, %v81
    %vm83 = vcmp.eq.f32.partialorder %v79, inf
    %v84 = vsel %vm83, %v79, %v82
    %vm85 = vcmp.eq.f32.partialorder %v79, 0.0
    %v86 = vand.u32 %v79, 2147483648
    %v87 = vsel %vm85, %v86, %v84
    %v88 = vrsqrt.pop %v80
    %v89 = vmul.f32 %v80, %v88
    %vm90 = vcmp.eq.f32.partialorder %v80, inf
    %v91 = vsel %vm90, %v80, %v89
    %vm92 = vcmp.eq.f32.partialorder %v80, 0.0
    %v93 = vand.u32 %v80, 2147483648
    %v94 = vsel %vm92, %v93, %v91
    %v95 = vadd.f32 %v87, 1e-06
    %v96 = vadd.f32 %v94, 1e-06
    %v97 = vrcp.pop %v95
    %v98 = vrcp.pop %v96
    %v99 = vlaneseq
    %v100 = vshrl.u32 %v99, 7
    %v101 = vsub.s32 1, %v100
    %v102 = vrot.slane %v58, %v101
    %v103 = vmul.f32 %v102, %v69
    %v104 = vmul.f32 %v102, %v70
    %v105 = vmul.f32 %v103, %v97
    %v106 = vmul.f32 %v104, %v98
    %108 = vrot.lane.b32.xlu0 %v102, 96
    %v109 = vpop.permute.xlu0 %108
    %v111 = vadd.f32 %v105, %v109
    %v112 = vadd.f32 %v106, %v109
    %v113 = vpack.c.bf16 %v112, %v111
    %v114 = vld [vmem:[%s1] sm:$0xf]
    %v115 = vld [vmem:[%s1 + $0x4] sm:$0xf]
    %v116 = vld [vmem:[%s1 + $0x8] sm:$0xf]
    %v117 = vld [vmem:[%s1 + $0xc] sm:$0xf]
    %v118 = vlaneseq
    %v119 = vshrl.u32 %v118, 7
    %v120 = vsub.s32 0, %v119
    %v121 = vrot.slane %v58, %v120
    %v126 = vunpack.c.l.b16 %v114
    %v127 = vunpack.c.l.b16 %v115
    %v128 = vunpack.c.l.b16 %v116
    %v129 = vunpack.c.l.b16 %v117
    %v130 = vpack.c.b16 %v127, %v126
    %v131 = vpack.c.b16 %v129, %v128
    %v135 = vsel %vm59, %v113, 0
    %137 = vmatprep.subr.bf16.mxu0 0
    %138 = vmatpush1.bf16.msra.mxu0 0
    %139 = vmatprep.subr.bf16.mxu0 0
    %140 = vmatpush1.bf16.msra.mxu0 0
    %141 = vmatprep.subr.bf16.mxu0 0
    %142 = vmatpush1.bf16.msra.mxu0 0
    %143 = vmatprep.subr.bf16.mxu0 0
    %144 = vmatpush1.bf16.msra.mxu0 0
    %145 = vmatprep.subr.bf16.mxu0 0
    %146 = vmatpush1.bf16.msra.mxu0 0
    %147 = vmatprep.subr.bf16.mxu0 0
    %148 = vmatpush1.bf16.msra.mxu0 0
    %149 = vmatprep.subr.bf16.mxu0 0
    %150 = vmatpush1.bf16.msra.mxu0 %v131
    %151 = vmatprep.subr.bf16.mxu0 0
    %152 = vmatpush1.bf16.msra.mxu0 %v130
    %153 = vmatprep.subr.bf16.mxu0 0
    %154 = vmatpush2.bf16.msra.mxu0 0
    %155 = vmatprep.subr.bf16.mxu0 0
    %156 = vmatpush2.bf16.msra.mxu0 0
    %157 = vmatprep.subr.bf16.mxu0 0
    %158 = vmatpush2.bf16.msra.mxu0 0
    %159 = vmatprep.subr.bf16.mxu0 0
    %160 = vmatpush2.bf16.msra.mxu0 0
    %161 = vmatprep.subr.bf16.mxu0 0
    %162 = vmatpush2.bf16.msra.mxu0 0
    %163 = vmatprep.subr.bf16.mxu0 0
    %164 = vmatpush2.bf16.msra.mxu0 0
    %165 = vmatprep.subr.bf16.mxu0 0
    %166 = vmatpush2.bf16.msra.mxu0 0
    %167 = vmatprep.subr.bf16.mxu0 0
    %168 = vmatpush2.bf16.msra.mxu0 0
    %169 = vmatprep.mubr.bf16.mxu0 0
    %170 = vmatmul.mubr.bf16.gmra.mxu0 %v135
    %v171 = vpop.f32.mrf.mxu0
    %v172 = vadd.f32 %v121, %v171
    %v173 = vpop.f32.mrf.mxu0
    %v174 = vpop.f32.mrf.mxu0
    %v175 = vadd.f32 %v121, %v174
    %v176 = vpop.f32.mrf.mxu0
    %177 = vdwg.mxu0
    %v178 = vld [vmem:[#allocation6] sm:$0xff]
    %v179 = vld [vmem:[#allocation6 + $0x8] sm:$0xff]
    %v180 = vpack.c.bf16 %v175, %v172
    %183 = vrot.lane.b32.xlu0 %v172, 96
    %v184 = vpop.permute.xlu0 %183
    %185 = vrot.lane.b32.xlu0 %v175, 96
    %v186 = vpop.permute.xlu0 %185
    %189 = vxpose.xlu0.b32.start [1/16] %v184, 128
    %190 = vxpose.xlu0.b32.cont [2/16] %v186, 128
    %191 = vxpose.xlu0.b32.cont [3/16] 0.0, 128
    %192 = vxpose.xlu0.b32.cont [4/16] 0.0, 128
    %193 = vxpose.xlu0.b32.cont [5/16] 0.0, 128
    %194 = vxpose.xlu0.b32.cont [6/16] 0.0, 128
    %195 = vxpose.xlu0.b32.cont [7/16] 0.0, 128
    %196 = vxpose.xlu0.b32.cont [8/16] 0.0, 128
    %197 = vxpose.xlu0.b32.cont [9/16] 0.0, 128
    %198 = vxpose.xlu0.b32.cont [10/16] 0.0, 128
    %199 = vxpose.xlu0.b32.cont [11/16] 0.0, 128
    %200 = vxpose.xlu0.b32.cont [12/16] 0.0, 128
    %201 = vxpose.xlu0.b32.cont [13/16] 0.0, 128
    %202 = vxpose.xlu0.b32.cont [14/16] 0.0, 128
    %203 = vxpose.xlu0.b32.cont [15/16] 0.0, 128
    %204 = vxpose.xlu0.b32.end [16/16] 0.0, 128
    %v205 = vpop.trf.xlu0
    %v206 = vpop.trf.xlu0
    %v207 = vpop.trf.xlu0
    %v208 = vpop.trf.xlu0
    %v209 = vpop.trf.xlu0
    %v210 = vpop.trf.xlu0
    %v211 = vpop.trf.xlu0
    %v212 = vpop.trf.xlu0
    %v213 = vpop.trf.xlu0
    %v214 = vpop.trf.xlu0
    %v215 = vpop.trf.xlu0
    %v216 = vpop.trf.xlu0
    %v217 = vpop.trf.xlu0
    %v218 = vpop.trf.xlu0
    %v219 = vpop.trf.xlu0
    %v220 = vpop.trf.xlu0
    %v221 = vpack.c.bf16 %v206, %v205
    %v222 = vpack.c.bf16 %v208, %v207
    %vm223 = vcmask 64512
    %v225 = vsel %vm223, %v180, 0
    %vm227 = vcmask 1043456
    %v229 = vsel %vm227, %v221, 0
    %231 = vmatprep.subr.bf16.mxu0 0
    %232 = vmatpush1.bf16.msra.mxu0 0
    %233 = vmatprep.subr.bf16.mxu0 0
    %234 = vmatpush1.bf16.msra.mxu0 0
    %235 = vmatprep.subr.bf16.mxu0 0
    %236 = vmatpush1.bf16.msra.mxu0 0
    %237 = vmatprep.subr.bf16.mxu0 0
    %238 = vmatpush1.bf16.msra.mxu0 0
    %239 = vmatprep.subr.bf16.mxu0 0
    %240 = vmatpush1.bf16.msra.mxu0 0
    %241 = vmatprep.subr.bf16.mxu0 0
    %242 = vmatpush1.bf16.msra.mxu0 0
    %243 = vmatprep.subr.bf16.mxu0 0
    %244 = vmatpush1.bf16.msra.mxu0 0
    %245 = vmatprep.subr.bf16.mxu0 0
    %246 = vmatpush1.bf16.msra.mxu0 %v229
    %247 = vmatprep.subr.bf16.mxu0 0
    %248 = vmatpush2.bf16.msra.mxu0 0
    %249 = vmatprep.subr.bf16.mxu0 0
    %250 = vmatpush2.bf16.msra.mxu0 0
    %251 = vmatprep.subr.bf16.mxu0 0
    %252 = vmatpush2.bf16.msra.mxu0 0
    %253 = vmatprep.subr.bf16.mxu0 0
    %254 = vmatpush2.bf16.msra.mxu0 0
    %255 = vmatprep.subr.bf16.mxu0 0
    %256 = vmatpush2.bf16.msra.mxu0 0
    %257 = vmatprep.subr.bf16.mxu0 0
    %258 = vmatpush2.bf16.msra.mxu0 0
    %259 = vmatprep.subr.bf16.mxu0 0
    %260 = vmatpush2.bf16.msra.mxu0 0
    %261 = vmatprep.subr.bf16.mxu0 0
    %262 = vmatpush2.bf16.msra.mxu0 0
    %263 = vmatprep.mubr.bf16.mxu0 0
    %264 = vmatmul.mubr.bf16.gmra.mxu0 %v225
    %v265 = vpop.f32.mrf.mxu0
    %v266 = vadd.f32 %v178, %v265
    %v267 = vpop.f32.mrf.mxu0
    %v268 = vpop.f32.mrf.mxu0
    %v269 = vadd.f32 %v179, %v268
    %v270 = vpop.f32.mrf.mxu0
    %271 = vdwg.mxu0
    %vm272 = vcmask 130048
    %v273 = vsel %vm272, %v266, -inf
    %274 = vmax.xlane.f32.xlu0 %v273
    %v275 = vpop.xlane.xlu0 %274
    %v276 = vsel %vm272, %v269, -inf
    %277 = vmax.xlane.f32.xlu0 %v276
    %v278 = vpop.xlane.xlu0 %277
    %v279 = vsub.f32 %v266, %v275
    %v280 = vsub.f32 %v269, %v278
    %v281 = vmul.f32 %v279, 1.442695
    %v282 = vpow.pop %v281
    %v283 = vmul.f32 %v280, 1.442695
    %v284 = vpow.pop %v283
    %v285 = vsel %vm272, %v282, 0.0
    %286 = vadd.xlane.f32.xlu0 %v285
    %v287 = vpop.xlane.xlu0 %286
    %v288 = vsel %vm272, %v284, 0.0
    %289 = vadd.xlane.f32.xlu0 %v288
    %v290 = vpop.xlane.xlu0 %289
    %v291 = vrcp.pop %v287
    %v292 = vrcp.pop %v290
    %v293 = vmul.f32 %v282, %v291
    %v294 = vmul.f32 %v284, %v292
    %v295 = vpack.c.bf16 %v294, %v293
    %297 = vrot.lane.b32.xlu0 %v180, 64
    %v298 = vpop.permute.xlu0 %297
    %v301 = vsel %vm272, %v295, 0
    %303 = vmatprep.subr.bf16.mxu0 0
    %304 = vmatpush1.bf16.msra.mxu0 0
    %305 = vmatprep.subr.bf16.mxu0 0
    %306 = vmatpush1.bf16.msra.mxu0 0
    %307 = vmatprep.subr.bf16.mxu0 0
    %308 = vmatpush1.bf16.msra.mxu0 0
    %309 = vmatprep.subr.bf16.mxu0 0
    %310 = vmatpush1.bf16.msra.mxu0 0
    %311 = vmatprep.subr.bf16.mxu0 0
    %312 = vmatpush1.bf16.msra.mxu0 0
    %313 = vmatprep.subr.bf16.mxu0 0
    %314 = vmatpush1.bf16.msra.mxu0 0
    %315 = vmatprep.subr.bf16.mxu0 0
    %316 = vmatpush1.bf16.msra.mxu0 0
    %317 = vmatprep.subr.bf16.mxu0 0
    %318 = vmatpush1.bf16.msra.mxu0 %v298
    %319 = vmatprep.subr.bf16.mxu0 0
    %320 = vmatpush2.bf16.msra.mxu0 0
    %321 = vmatprep.subr.bf16.mxu0 0
    %322 = vmatpush2.bf16.msra.mxu0 0
    %323 = vmatprep.subr.bf16.mxu0 0
    %324 = vmatpush2.bf16.msra.mxu0 0
    %325 = vmatprep.subr.bf16.mxu0 0
    %326 = vmatpush2.bf16.msra.mxu0 0
    %327 = vmatprep.subr.bf16.mxu0 0
    %328 = vmatpush2.bf16.msra.mxu0 0
    %329 = vmatprep.subr.bf16.mxu0 0
    %330 = vmatpush2.bf16.msra.mxu0 0
    %331 = vmatprep.subr.bf16.mxu0 0
    %332 = vmatpush2.bf16.msra.mxu0 0
    %333 = vmatprep.subr.bf16.mxu0 0
    %334 = vmatpush2.bf16.msra.mxu0 0
    %335 = vmatprep.mubr.bf16.mxu0 0
    %336 = vmatmul.mubr.bf16.gmra.mxu0 %v301
    %v337 = vpop.f32.mrf.mxu0
    %v338 = vadd.f32 0.0, %v337
    %v339 = vpop.f32.mrf.mxu0
    %v340 = vpop.f32.mrf.mxu0
    %v341 = vadd.f32 0.0, %v340
    %v342 = vpop.f32.mrf.mxu0
    %343 = vdwg.mxu0
    %344 = vst.msk [vmem:[#allocation2] sm:$0xff] %vm223, %v338
    %345 = vst.msk [vmem:[#allocation2 + $0x8] sm:$0xff] %vm223, %v341
    %346 = vrot.lane.b32.xlu0 %v180, 120
    %v347 = vpop.permute.xlu0 %346
    %v349 = vrot.slane %v221, 4
    %v351 = vsel %vm223, %v347, 0
    %v354 = vsel %vm227, %v349, 0
    %356 = vmatprep.subr.bf16.mxu0 0
    %357 = vmatpush1.bf16.msra.mxu0 0
    %358 = vmatprep.subr.bf16.mxu0 0
    %359 = vmatpush1.bf16.msra.mxu0 0
    %360 = vmatprep.subr.bf16.mxu0 0
    %361 = vmatpush1.bf16.msra.mxu0 0
    %362 = vmatprep.subr.bf16.mxu0 0
    %363 = vmatpush1.bf16.msra.mxu0 0
    %364 = vmatprep.subr.bf16.mxu0 0
    %365 = vmatpush1.bf16.msra.mxu0 0
    %366 = vmatprep.subr.bf16.mxu0 0
    %367 = vmatpush1.bf16.msra.mxu0 0
    %368 = vmatprep.subr.bf16.mxu0 0
    %369 = vmatpush1.bf16.msra.mxu0 0
    %370 = vmatprep.subr.bf16.mxu0 0
    %371 = vmatpush1.bf16.msra.mxu0 %v354
    %372 = vmatprep.subr.bf16.mxu0 0
    %373 = vmatpush2.bf16.msra.mxu0 0
    %374 = vmatprep.subr.bf16.mxu0 0
    %375 = vmatpush2.bf16.msra.mxu0 0
    %376 = vmatprep.subr.bf16.mxu0 0
    %377 = vmatpush2.bf16.msra.mxu0 0
    %378 = vmatprep.subr.bf16.mxu0 0
    %379 = vmatpush2.bf16.msra.mxu0 0
    %380 = vmatprep.subr.bf16.mxu0 0
    %381 = vmatpush2.bf16.msra.mxu0 0
    %382 = vmatprep.subr.bf16.mxu0 0
    %383 = vmatpush2.bf16.msra.mxu0 0
    %384 = vmatprep.subr.bf16.mxu0 0
    %385 = vmatpush2.bf16.msra.mxu0 0
    %386 = vmatprep.subr.bf16.mxu0 0
    %387 = vmatpush2.bf16.msra.mxu0 0
    %388 = vmatprep.mubr.bf16.mxu0 0
    %389 = vmatmul.mubr.bf16.gmra.mxu0 %v351
    %v390 = vpop.f32.mrf.mxu0
    %v391 = vadd.f32 %v178, %v390
    %v392 = vpop.f32.mrf.mxu0
    %v393 = vpop.f32.mrf.mxu0
    %v394 = vadd.f32 %v179, %v393
    %v395 = vpop.f32.mrf.mxu0
    %396 = vdwg.mxu0
    %v397 = vsel %vm272, %v391, -inf
    %398 = vmax.xlane.f32.xlu0 %v397
    %v399 = vpop.xlane.xlu0 %398
    %v400 = vsel %vm272, %v394, -inf
    %401 = vmax.xlane.f32.xlu0 %v400
    %v402 = vpop.xlane.xlu0 %401
    %v403 = vsub.f32 %v391, %v399
    %v404 = vsub.f32 %v394, %v402
    %v405 = vmul.f32 %v403, 1.442695
    %v406 = vpow.pop %v405
    %v407 = vmul.f32 %v404, 1.442695
    %v408 = vpow.pop %v407
    %v409 = vsel %vm272, %v406, 0.0
    %410 = vadd.xlane.f32.xlu0 %v409
    %v411 = vpop.xlane.xlu0 %410
    %v412 = vsel %vm272, %v408, 0.0
    %413 = vadd.xlane.f32.xlu0 %v412
    %v414 = vpop.xlane.xlu0 %413
    %v415 = vrcp.pop %v411
    %v416 = vrcp.pop %v414
    %v417 = vmul.f32 %v406, %v415
    %v418 = vmul.f32 %v408, %v416
    %v419 = vpack.c.bf16 %v418, %v417
    %420 = vrot.lane.b32.xlu0 %v180, 56
    %v421 = vpop.permute.xlu0 %420
    %v424 = vsel %vm272, %v419, 0
    %426 = vmatprep.subr.bf16.mxu0 0
    %427 = vmatpush1.bf16.msra.mxu0 0
    %428 = vmatprep.subr.bf16.mxu0 0
    %429 = vmatpush1.bf16.msra.mxu0 0
    %430 = vmatprep.subr.bf16.mxu0 0
    %431 = vmatpush1.bf16.msra.mxu0 0
    %432 = vmatprep.subr.bf16.mxu0 0
    %433 = vmatpush1.bf16.msra.mxu0 0
    %434 = vmatprep.subr.bf16.mxu0 0
    %435 = vmatpush1.bf16.msra.mxu0 0
    %436 = vmatprep.subr.bf16.mxu0 0
    %437 = vmatpush1.bf16.msra.mxu0 0
    %438 = vmatprep.subr.bf16.mxu0 0
    %439 = vmatpush1.bf16.msra.mxu0 0
    %440 = vmatprep.subr.bf16.mxu0 0
    %441 = vmatpush1.bf16.msra.mxu0 %v421
    %442 = vmatprep.subr.bf16.mxu0 0
    %443 = vmatpush2.bf16.msra.mxu0 0
    %444 = vmatprep.subr.bf16.mxu0 0
    %445 = vmatpush2.bf16.msra.mxu0 0
    %446 = vmatprep.subr.bf16.mxu0 0
    %447 = vmatpush2.bf16.msra.mxu0 0
    %448 = vmatprep.subr.bf16.mxu0 0
    %449 = vmatpush2.bf16.msra.mxu0 0
    %450 = vmatprep.subr.bf16.mxu0 0
    %451 = vmatpush2.bf16.msra.mxu0 0
    %452 = vmatprep.subr.bf16.mxu0 0
    %453 = vmatpush2.bf16.msra.mxu0 0
    %454 = vmatprep.subr.bf16.mxu0 0
    %455 = vmatpush2.bf16.msra.mxu0 0
    %456 = vmatprep.subr.bf16.mxu0 0
    %457 = vmatpush2.bf16.msra.mxu0 0
    %458 = vmatprep.mubr.bf16.mxu0 0
    %459 = vmatmul.mubr.bf16.gmra.mxu0 %v424
    %v460 = vpop.f32.mrf.mxu0
    %v461 = vadd.f32 0.0, %v460
    %v462 = vpop.f32.mrf.mxu0
    %v463 = vpop.f32.mrf.mxu0
    %v464 = vadd.f32 0.0, %v463
    %v465 = vpop.f32.mrf.mxu0
    %466 = vdwg.mxu0
    %469 = vrot.lane.b32.xlu0 %v461, 8
    %v470 = vpop.permute.xlu0 %469
    %471 = vrot.lane.b32.xlu0 %v464, 8
    %v472 = vpop.permute.xlu0 %471
    %vm475 = vcmask 130112
    %476 = vst.msk [vmem:[#allocation2] sm:$0xff] %vm475, %v470
    %477 = vst.msk [vmem:[#allocation2 + $0x8] sm:$0xff] %vm475, %v472
    %478 = vrot.lane.b32.xlu0 %v180, 112
    %v479 = vpop.permute.xlu0 %478
    %v481 = vsel %vm223, %v479, 0
    %v484 = vsel %vm227, %v222, 0
    %486 = vmatprep.subr.bf16.mxu0 0
    %487 = vmatpush1.bf16.msra.mxu0 0
    %488 = vmatprep.subr.bf16.mxu0 0
    %489 = vmatpush1.bf16.msra.mxu0 0
    %490 = vmatprep.subr.bf16.mxu0 0
    %491 = vmatpush1.bf16.msra.mxu0 0
    %492 = vmatprep.subr.bf16.mxu0 0
    %493 = vmatpush1.bf16.msra.mxu0 0
    %494 = vmatprep.subr.bf16.mxu0 0
    %495 = vmatpush1.bf16.msra.mxu0 0
    %496 = vmatprep.subr.bf16.mxu0 0
    %497 = vmatpush1.bf16.msra.mxu0 0
    %498 = vmatprep.subr.bf16.mxu0 0
    %499 = vmatpush1.bf16.msra.mxu0 0
    %500 = vmatprep.subr.bf16.mxu0 0
    %501 = vmatpush1.bf16.msra.mxu0 %v484
    %502 = vmatprep.subr.bf16.mxu0 0
    %503 = vmatpush2.bf16.msra.mxu0 0
    %504 = vmatprep.subr.bf16.mxu0 0
    %505 = vmatpush2.bf16.msra.mxu0 0
    %506 = vmatprep.subr.bf16.mxu0 0
    %507 = vmatpush2.bf16.msra.mxu0 0
    %508 = vmatprep.subr.bf16.mxu0 0
    %509 = vmatpush2.bf16.msra.mxu0 0
    %510 = vmatprep.subr.bf16.mxu0 0
    %511 = vmatpush2.bf16.msra.mxu0 0
    %512 = vmatprep.subr.bf16.mxu0 0
    %513 = vmatpush2.bf16.msra.mxu0 0
    %514 = vmatprep.subr.bf16.mxu0 0
    %515 = vmatpush2.bf16.msra.mxu0 0
    %516 = vmatprep.subr.bf16.mxu0 0
    %517 = vmatpush2.bf16.msra.mxu0 0
    %518 = vmatprep.mubr.bf16.mxu0 0
    %519 = vmatmul.mubr.bf16.gmra.mxu0 %v481
    %v520 = vpop.f32.mrf.mxu0
    %v521 = vadd.f32 %v178, %v520
    %v522 = vpop.f32.mrf.mxu0
    %v523 = vpop.f32.mrf.mxu0
    %v524 = vadd.f32 %v179, %v523
    %v525 = vpop.f32.mrf.mxu0
    %526 = vdwg.mxu0
    %v527 = vsel %vm272, %v521, -inf
    %528 = vmax.xlane.f32.xlu0 %v527
    %v529 = vpop.xlane.xlu0 %528
    %v530 = vsel %vm272, %v524, -inf
    %531 = vmax.xlane.f32.xlu0 %v530
    %v532 = vpop.xlane.xlu0 %531
    %v533 = vsub.f32 %v521, %v529
    %v534 = vsub.f32 %v524, %v532
    %v535 = vmul.f32 %v533, 1.442695
    %v536 = vpow.pop %v535
    %v537 = vmul.f32 %v534, 1.442695
    %v538 = vpow.pop %v537
    %v539 = vsel %vm272, %v536, 0.0
    %540 = vadd.xlane.f32.xlu0 %v539
    %v541 = vpop.xlane.xlu0 %540
    %v542 = vsel %vm272, %v538, 0.0
    %543 = vadd.xlane.f32.xlu0 %v542
    %v544 = vpop.xlane.xlu0 %543
    %v545 = vrcp.pop %v541
    %v546 = vrcp.pop %v544
    %v547 = vmul.f32 %v536, %v545
    %v548 = vmul.f32 %v538, %v546
    %v549 = vpack.c.bf16 %v548, %v547
    %550 = vrot.lane.b32.xlu0 %v180, 48
    %v551 = vpop.permute.xlu0 %550
    %v554 = vsel %vm272, %v549, 0
    %556 = vmatprep.subr.bf16.mxu0 0
    %557 = vmatpush1.bf16.msra.mxu0 0
    %558 = vmatprep.subr.bf16.mxu0 0
    %559 = vmatpush1.bf16.msra.mxu0 0
    %560 = vmatprep.subr.bf16.mxu0 0
    %561 = vmatpush1.bf16.msra.mxu0 0
    %562 = vmatprep.subr.bf16.mxu0 0
    %563 = vmatpush1.bf16.msra.mxu0 0
    %564 = vmatprep.subr.bf16.mxu0 0
    %565 = vmatpush1.bf16.msra.mxu0 0
    %566 = vmatprep.subr.bf16.mxu0 0
    %567 = vmatpush1.bf16.msra.mxu0 0
    %568 = vmatprep.subr.bf16.mxu0 0
    %569 = vmatpush1.bf16.msra.mxu0 0
    %570 = vmatprep.subr.bf16.mxu0 0
    %571 = vmatpush1.bf16.msra.mxu0 %v551
    %572 = vmatprep.subr.bf16.mxu0 0
    %573 = vmatpush2.bf16.msra.mxu0 0
    %574 = vmatprep.subr.bf16.mxu0 0
    %575 = vmatpush2.bf16.msra.mxu0 0
    %576 = vmatprep.subr.bf16.mxu0 0
    %577 = vmatpush2.bf16.msra.mxu0 0
    %578 = vmatprep.subr.bf16.mxu0 0
    %579 = vmatpush2.bf16.msra.mxu0 0
    %580 = vmatprep.subr.bf16.mxu0 0
    %581 = vmatpush2.bf16.msra.mxu0 0
    %582 = vmatprep.subr.bf16.mxu0 0
    %583 = vmatpush2.bf16.msra.mxu0 0
    %584 = vmatprep.subr.bf16.mxu0 0
    %585 = vmatpush2.bf16.msra.mxu0 0
    %586 = vmatprep.subr.bf16.mxu0 0
    %587 = vmatpush2.bf16.msra.mxu0 0
    %588 = vmatprep.mubr.bf16.mxu0 0
    %589 = vmatmul.mubr.bf16.gmra.mxu0 %v554
    %v590 = vpop.f32.mrf.mxu0
    %v591 = vadd.f32 0.0, %v590
    %v592 = vpop.f32.mrf.mxu0
    %v593 = vpop.f32.mrf.mxu0
    %v594 = vadd.f32 0.0, %v593
    %v595 = vpop.f32.mrf.mxu0
    %596 = vdwg.mxu0
    %599 = vrot.lane.b32.xlu0 %v591, 16
    %v600 = vpop.permute.xlu0 %599
    %601 = vrot.lane.b32.xlu0 %v594, 16
    %v602 = vpop.permute.xlu0 %601
    %vm605 = vcmask 195712
    %606 = vst.msk [vmem:[#allocation2] sm:$0xff] %vm605, %v600
    %607 = vst.msk [vmem:[#allocation2 + $0x8] sm:$0xff] %vm605, %v602
    %608 = vrot.lane.b32.xlu0 %v180, 104
    %v609 = vpop.permute.xlu0 %608
    %v611 = vrot.slane %v222, 4
    %v613 = vsel %vm223, %v609, 0
    %v616 = vsel %vm227, %v611, 0
    %618 = vmatprep.subr.bf16.mxu0 0
    %619 = vmatpush1.bf16.msra.mxu0 0
    %620 = vmatprep.subr.bf16.mxu0 0
    %621 = vmatpush1.bf16.msra.mxu0 0
    %622 = vmatprep.subr.bf16.mxu0 0
    %623 = vmatpush1.bf16.msra.mxu0 0
    %624 = vmatprep.subr.bf16.mxu0 0
    %625 = vmatpush1.bf16.msra.mxu0 0
    %626 = vmatprep.subr.bf16.mxu0 0
    %627 = vmatpush1.bf16.msra.mxu0 0
    %628 = vmatprep.subr.bf16.mxu0 0
    %629 = vmatpush1.bf16.msra.mxu0 0
    %630 = vmatprep.subr.bf16.mxu0 0
    %631 = vmatpush1.bf16.msra.mxu0 0
    %632 = vmatprep.subr.bf16.mxu0 0
    %633 = vmatpush1.bf16.msra.mxu0 %v616
    %634 = vmatprep.subr.bf16.mxu0 0
    %635 = vmatpush2.bf16.msra.mxu0 0
    %636 = vmatprep.subr.bf16.mxu0 0
    %637 = vmatpush2.bf16.msra.mxu0 0
    %638 = vmatprep.subr.bf16.mxu0 0
    %639 = vmatpush2.bf16.msra.mxu0 0
    %640 = vmatprep.subr.bf16.mxu0 0
    %641 = vmatpush2.bf16.msra.mxu0 0
    %642 = vmatprep.subr.bf16.mxu0 0
    %643 = vmatpush2.bf16.msra.mxu0 0
    %644 = vmatprep.subr.bf16.mxu0 0
    %645 = vmatpush2.bf16.msra.mxu0 0
    %646 = vmatprep.subr.bf16.mxu0 0
    %647 = vmatpush2.bf16.msra.mxu0 0
    %648 = vmatprep.subr.bf16.mxu0 0
    %649 = vmatpush2.bf16.msra.mxu0 0
    %650 = vmatprep.mubr.bf16.mxu0 0
    %651 = vmatmul.mubr.bf16.gmra.mxu0 %v613
    %v652 = vpop.f32.mrf.mxu0
    %v653 = vadd.f32 %v178, %v652
    %v654 = vpop.f32.mrf.mxu0
    %v655 = vpop.f32.mrf.mxu0
    %v656 = vadd.f32 %v179, %v655
    %v657 = vpop.f32.mrf.mxu0
    %658 = vdwg.mxu0
    %v659 = vsel %vm272, %v653, -inf
    %660 = vmax.xlane.f32.xlu0 %v659
    %v661 = vpop.xlane.xlu0 %660
    %v662 = vsel %vm272, %v656, -inf
    %663 = vmax.xlane.f32.xlu0 %v662
    %v664 = vpop.xlane.xlu0 %663
    %v665 = vsub.f32 %v653, %v661
    %v666 = vsub.f32 %v656, %v664
    %v667 = vmul.f32 %v665, 1.442695
    %v668 = vpow.pop %v667
    %v669 = vmul.f32 %v666, 1.442695
    %v670 = vpow.pop %v669
    %v671 = vsel %vm272, %v668, 0.0
    %672 = vadd.xlane.f32.xlu0 %v671
    %v673 = vpop.xlane.xlu0 %672
    %v674 = vsel %vm272, %v670, 0.0
    %675 = vadd.xlane.f32.xlu0 %v674
    %v676 = vpop.xlane.xlu0 %675
    %v677 = vrcp.pop %v673
    %v678 = vrcp.pop %v676
    %v679 = vmul.f32 %v668, %v677
    %v680 = vmul.f32 %v670, %v678
    %v681 = vpack.c.bf16 %v680, %v679
    %682 = vrot.lane.b32.xlu0 %v180, 40
    %v683 = vpop.permute.xlu0 %682
    %v686 = vsel %vm272, %v681, 0
    %688 = vmatprep.subr.bf16.mxu0 0
    %689 = vmatpush1.bf16.msra.mxu0 0
    %690 = vmatprep.subr.bf16.mxu0 0
    %691 = vmatpush1.bf16.msra.mxu0 0
    %692 = vmatprep.subr.bf16.mxu0 0
    %693 = vmatpush1.bf16.msra.mxu0 0
    %694 = vmatprep.subr.bf16.mxu0 0
    %695 = vmatpush1.bf16.msra.mxu0 0
    %696 = vmatprep.subr.bf16.mxu0 0
    %697 = vmatpush1.bf16.msra.mxu0 0
    %698 = vmatprep.subr.bf16.mxu0 0
    %699 = vmatpush1.bf16.msra.mxu0 0
    %700 = vmatprep.subr.bf16.mxu0 0
    %701 = vmatpush1.bf16.msra.mxu0 0
    %702 = vmatprep.subr.bf16.mxu0 0
    %703 = vmatpush1.bf16.msra.mxu0 %v683
    %704 = vmatprep.subr.bf16.mxu0 0
    %705 = vmatpush2.bf16.msra.mxu0 0
    %706 = vmatprep.subr.bf16.mxu0 0
    %707 = vmatpush2.bf16.msra.mxu0 0
    %708 = vmatprep.subr.bf16.mxu0 0
    %709 = vmatpush2.bf16.msra.mxu0 0
    %710 = vmatprep.subr.bf16.mxu0 0
    %711 = vmatpush2.bf16.msra.mxu0 0
    %712 = vmatprep.subr.bf16.mxu0 0
    %713 = vmatpush2.bf16.msra.mxu0 0
    %714 = vmatprep.subr.bf16.mxu0 0
    %715 = vmatpush2.bf16.msra.mxu0 0
    %716 = vmatprep.subr.bf16.mxu0 0
    %717 = vmatpush2.bf16.msra.mxu0 0
    %718 = vmatprep.subr.bf16.mxu0 0
    %719 = vmatpush2.bf16.msra.mxu0 0
    %720 = vmatprep.mubr.bf16.mxu0 0
    %721 = vmatmul.mubr.bf16.gmra.mxu0 %v686
    %v722 = vpop.f32.mrf.mxu0
    %v723 = vadd.f32 0.0, %v722
    %v724 = vpop.f32.mrf.mxu0
    %v725 = vpop.f32.mrf.mxu0
    %v726 = vadd.f32 0.0, %v725
    %v727 = vpop.f32.mrf.mxu0
    %728 = vdwg.mxu0
    %731 = vrot.lane.b32.xlu0 %v723, 24
    %v732 = vpop.permute.xlu0 %731
    %733 = vrot.lane.b32.xlu0 %v726, 24
    %v734 = vpop.permute.xlu0 %733
    %vm737 = vcmask 261312
    %738 = vst.msk [vmem:[#allocation2] sm:$0xff] %vm737, %v732
    %739 = vst.msk [vmem:[#allocation2 + $0x8] sm:$0xff] %vm737, %v734
    %v740 = vld [vmem:[#allocation2] sm:$0xff]
    %v741 = vld [vmem:[#allocation2 + $0x8] sm:$0xff]
    %v742 = vpack.c.bf16 %v741, %v740
    %v743 = vld [vmem:[%s2] sm:$0xf]
    %v744 = vld [vmem:[%s2 + $0x4] sm:$0xf]
    %v745 = vld [vmem:[%s2 + $0x8] sm:$0xf]
    %v746 = vld [vmem:[%s2 + $0xc] sm:$0xf]
    %v751 = vunpack.c.l.b16 %v743
    %v752 = vunpack.c.l.b16 %v744
    %v753 = vunpack.c.l.b16 %v745
    %v754 = vunpack.c.l.b16 %v746
    %v755 = vpack.c.b16 %v752, %v751
    %v756 = vpack.c.b16 %v754, %v753
    %v760 = vsel %vm59, %v742, 0
    %762 = vmatprep.subr.bf16.mxu0 0
    %763 = vmatpush1.bf16.msra.mxu0 0
    %764 = vmatprep.subr.bf16.mxu0 0
    %765 = vmatpush1.bf16.msra.mxu0 0
    %766 = vmatprep.subr.bf16.mxu0 0
    %767 = vmatpush1.bf16.msra.mxu0 0
    %768 = vmatprep.subr.bf16.mxu0 0
    %769 = vmatpush1.bf16.msra.mxu0 0
    %770 = vmatprep.subr.bf16.mxu0 0
    %771 = vmatpush1.bf16.msra.mxu0 0
    %772 = vmatprep.subr.bf16.mxu0 0
    %773 = vmatpush1.bf16.msra.mxu0 0
    %774 = vmatprep.subr.bf16.mxu0 0
    %775 = vmatpush1.bf16.msra.mxu0 %v756
    %776 = vmatprep.subr.bf16.mxu0 0
    %777 = vmatpush1.bf16.msra.mxu0 %v755
    %778 = vmatprep.subr.bf16.mxu0 0
    %779 = vmatpush2.bf16.msra.mxu0 0
    %780 = vmatprep.subr.bf16.mxu0 0
    %781 = vmatpush2.bf16.msra.mxu0 0
    %782 = vmatprep.subr.bf16.mxu0 0
    %783 = vmatpush2.bf16.msra.mxu0 0
    %784 = vmatprep.subr.bf16.mxu0 0
    %785 = vmatpush2.bf16.msra.mxu0 0
    %786 = vmatprep.subr.bf16.mxu0 0
    %787 = vmatpush2.bf16.msra.mxu0 0
    %788 = vmatprep.subr.bf16.mxu0 0
    %789 = vmatpush2.bf16.msra.mxu0 0
    %790 = vmatprep.subr.bf16.mxu0 0
    %791 = vmatpush2.bf16.msra.mxu0 0
    %792 = vmatprep.subr.bf16.mxu0 0
    %793 = vmatpush2.bf16.msra.mxu0 0
    %794 = vmatprep.mubr.bf16.mxu0 0
    %795 = vmatmul.mubr.bf16.gmra.mxu0 %v760
    %v796 = vpop.f32.mrf.mxu0
    %v797 = vadd.f32 0.0, %v796
    %v798 = vpop.f32.mrf.mxu0
    %v799 = vpop.f32.mrf.mxu0
    %v800 = vadd.f32 0.0, %v799
    %v801 = vpop.f32.mrf.mxu0
    %802 = vdwg.mxu0
    %v803 = vadd.f32 %v56, %v797
    %v804 = vadd.f32 %v57, %v800
    %805 = vrot.lane.b32.xlu0 %v102, 64
    %v806 = vpop.permute.xlu0 %805
    %v808 = vadd.f32 %v803, %v806
    %v809 = vadd.f32 %v804, %v806
    %v810 = vsel %vm59, %v808, 0.0
    %811 = vadd.xlane.f32.xlu0 %v810
    %v812 = vpop.xlane.xlu0 %811
    %v813 = vsel %vm59, %v809, 0.0
    %814 = vadd.xlane.f32.xlu0 %v813
    %v815 = vpop.xlane.xlu0 %814
    %v816 = vmul.f32 %v812, %v66
    %v817 = vmul.f32 %v815, %v66
    %v818 = vsub.f32 %v808, %v816
    %v819 = vsub.f32 %v809, %v817
    %v820 = vmul.f32 %v818, %v818
    %v821 = vmul.f32 %v819, %v819
    %v822 = vsel %vm59, %v820, 0.0
    %823 = vadd.xlane.f32.xlu0 %v822
    %v824 = vpop.xlane.xlu0 %823
    %v825 = vsel %vm59, %v821, 0.0
    %826 = vadd.xlane.f32.xlu0 %v825
    %v827 = vpop.xlane.xlu0 %826
    %v828 = vmul.f32 %v824, 0.032258064
    %v829 = vmul.f32 %v827, 0.032258064
    %v830 = vrsqrt.pop %v828
    %v831 = vmul.f32 %v828, %v830
    %vm832 = vcmp.eq.f32.partialorder %v828, inf
    %v833 = vsel %vm832, %v828, %v831
    %vm834 = vcmp.eq.f32.partialorder %v828, 0.0
    %v835 = vand.u32 %v828, 2147483648
    %v836 = vsel %vm834, %v835, %v833
    %v837 = vrsqrt.pop %v829
    %v838 = vmul.f32 %v829, %v837
    %vm839 = vcmp.eq.f32.partialorder %v829, inf
    %v840 = vsel %vm839, %v829, %v838
    %vm841 = vcmp.eq.f32.partialorder %v829, 0.0
    %v842 = vand.u32 %v829, 2147483648
    %v843 = vsel %vm841, %v842, %v840
    %v844 = vadd.f32 %v836, 1e-06
    %v845 = vadd.f32 %v843, 1e-06
    %v846 = vrcp.pop %v844
    %v847 = vrcp.pop %v845
    %v848 = vlaneseq
    %v849 = vshrl.u32 %v848, 7
    %v850 = vsub.s32 2, %v849
    %v851 = vrot.slane %v58, %v850
    %v852 = vmul.f32 %v851, %v818
    %v853 = vmul.f32 %v851, %v819
    %v854 = vmul.f32 %v852, %v846
    %v855 = vmul.f32 %v853, %v847
    %857 = vrot.lane.b32.xlu0 %v851, 96
    %v858 = vpop.permute.xlu0 %857
    %v860 = vadd.f32 %v854, %v858
    %v861 = vadd.f32 %v855, %v858
    %v862 = vpack.c.bf16 %v861, %v860
    %v863 = vld [vmem:[#allocation3] sm:$0xf]
    %v864 = vld [vmem:[#allocation3 + $0x4] sm:$0xf]
    %v865 = vld [vmem:[#allocation3 + $0x8] sm:$0xf]
    %v866 = vld [vmem:[#allocation3 + $0xc] sm:$0xf]
    %v867 = vlaneseq
    %v868 = vshrl.u32 %v867, 7
    %v869 = vsub.s32 3, %v868
    %v870 = vrot.slane %v58, %v869
    %v875 = vunpack.c.l.b16 %v863
    %v876 = vunpack.c.l.b16 %v864
    %v877 = vunpack.c.l.b16 %v865
    %v878 = vunpack.c.l.b16 %v866
    %v879 = vpack.c.b16 %v876, %v875
    %v880 = vpack.c.b16 %v878, %v877
    %v884 = vsel %vm59, %v862, 0
    %886 = vmatprep.subr.bf16.mxu0 0
    %887 = vmatpush1.bf16.msra.mxu0 0
    %888 = vmatprep.subr.bf16.mxu0 0
    %889 = vmatpush1.bf16.msra.mxu0 0
    %890 = vmatprep.subr.bf16.mxu0 0
    %891 = vmatpush1.bf16.msra.mxu0 0
    %892 = vmatprep.subr.bf16.mxu0 0
    %893 = vmatpush1.bf16.msra.mxu0 0
    %894 = vmatprep.subr.bf16.mxu0 0
    %895 = vmatpush1.bf16.msra.mxu0 0
    %896 = vmatprep.subr.bf16.mxu0 0
    %897 = vmatpush1.bf16.msra.mxu0 0
    %898 = vmatprep.subr.bf16.mxu0 0
    %899 = vmatpush1.bf16.msra.mxu0 %v880
    %900 = vmatprep.subr.bf16.mxu0 0
    %901 = vmatpush1.bf16.msra.mxu0 %v879
    %902 = vmatprep.subr.bf16.mxu0 0
    %903 = vmatpush2.bf16.msra.mxu0 0
    %904 = vmatprep.subr.bf16.mxu0 0
    %905 = vmatpush2.bf16.msra.mxu0 0
    %906 = vmatprep.subr.bf16.mxu0 0
    %907 = vmatpush2.bf16.msra.mxu0 0
    %908 = vmatprep.subr.bf16.mxu0 0
    %909 = vmatpush2.bf16.msra.mxu0 0
    %910 = vmatprep.subr.bf16.mxu0 0
    %911 = vmatpush2.bf16.msra.mxu0 0
    %912 = vmatprep.subr.bf16.mxu0 0
    %913 = vmatpush2.bf16.msra.mxu0 0
    %914 = vmatprep.subr.bf16.mxu0 0
    %915 = vmatpush2.bf16.msra.mxu0 0
    %916 = vmatprep.subr.bf16.mxu0 0
    %917 = vmatpush2.bf16.msra.mxu0 0
    %918 = vmatprep.mubr.bf16.mxu0 0
    %919 = vmatmul.mubr.bf16.gmra.mxu0 %v884
    %v920 = vpop.f32.mrf.mxu0
    %v921 = vadd.f32 %v870, %v920
    %v922 = vpop.f32.mrf.mxu0
    %v923 = vpop.f32.mrf.mxu0
    %v924 = vadd.f32 %v870, %v923
    %v925 = vpop.f32.mrf.mxu0
    %926 = vdwg.mxu0
    %v927 = vmax.f32 %v921, 0.0
    %v928 = vmax.f32 %v924, 0.0
    %v929 = vpack.c.bf16 %v928, %v927
    %v930 = vld [vmem:[%s4] sm:$0xf]
    %v931 = vld [vmem:[%s4 + $0x4] sm:$0xf]
    %v932 = vld [vmem:[%s4 + $0x8] sm:$0xf]
    %v933 = vld [vmem:[%s4 + $0xc] sm:$0xf]
    %v934 = vld [vmem:[%s4 + $0x10] sm:$0xf]
    %v935 = vld [vmem:[%s4 + $0x14] sm:$0xf]
    %v936 = vld [vmem:[%s4 + $0x18] sm:$0xf]
    %v937 = vld [vmem:[%s4 + $0x1c] sm:$0xf]
    %v946 = vunpack.c.l.b16 %v930
    %v947 = vunpack.c.l.b16 %v931
    %v948 = vunpack.c.l.b16 %v932
    %v949 = vunpack.c.l.b16 %v933
    %v950 = vunpack.c.l.b16 %v934
    %v951 = vunpack.c.l.b16 %v935
    %v952 = vunpack.c.l.b16 %v936
    %v953 = vunpack.c.l.b16 %v937
    %v954 = vpack.c.b16 %v947, %v946
    %v955 = vpack.c.b16 %v949, %v948
    %v956 = vpack.c.b16 %v951, %v950
    %v957 = vpack.c.b16 %v953, %v952
    %962 = vrot.lane.b32.xlu0 %v851, 64
    %v963 = vpop.permute.xlu0 %962
    %vm965 = vcmask 523264
    %v967 = vsel %vm965, %v929, 0
    %969 = vmatprep.subr.bf16.mxu0 0
    %970 = vmatpush1.bf16.msra.mxu0 0
    %971 = vmatprep.subr.bf16.mxu0 0
    %972 = vmatpush1.bf16.msra.mxu0 0
    %973 = vmatprep.subr.bf16.mxu0 0
    %974 = vmatpush1.bf16.msra.mxu0 0
    %975 = vmatprep.subr.bf16.mxu0 0
    %976 = vmatpush1.bf16.msra.mxu0 0
    %977 = vmatprep.subr.bf16.mxu0 0
    %978 = vmatpush1.bf16.msra.mxu0 %v957
    %979 = vmatprep.subr.bf16.mxu0 0
    %980 = vmatpush1.bf16.msra.mxu0 %v956
    %981 = vmatprep.subr.bf16.mxu0 0
    %982 = vmatpush1.bf16.msra.mxu0 %v955
    %983 = vmatprep.subr.bf16.mxu0 0
    %984 = vmatpush1.bf16.msra.mxu0 %v954
    %985 = vmatprep.subr.bf16.mxu0 0
    %986 = vmatpush2.bf16.msra.mxu0 0
    %987 = vmatprep.subr.bf16.mxu0 0
    %988 = vmatpush2.bf16.msra.mxu0 0
    %989 = vmatprep.subr.bf16.mxu0 0
    %990 = vmatpush2.bf16.msra.mxu0 0
    %991 = vmatprep.subr.bf16.mxu0 0
    %992 = vmatpush2.bf16.msra.mxu0 0
    %993 = vmatprep.subr.bf16.mxu0 0
    %994 = vmatpush2.bf16.msra.mxu0 0
    %995 = vmatprep.subr.bf16.mxu0 0
    %996 = vmatpush2.bf16.msra.mxu0 0
    %997 = vmatprep.subr.bf16.mxu0 0
    %998 = vmatpush2.bf16.msra.mxu0 0
    %999 = vmatprep.subr.bf16.mxu0 0
    %1000 = vmatpush2.bf16.msra.mxu0 0
    %1001 = vmatprep.mubr.bf16.mxu0 0
    %1002 = vmatmul.mubr.bf16.gmra.mxu0 %v967
    %v1003 = vpop.f32.mrf.mxu0
    %v1004 = vadd.f32 %v963, %v1003
    %v1005 = vpop.f32.mrf.mxu0
    %v1006 = vpop.f32.mrf.mxu0
    %v1007 = vadd.f32 %v963, %v1006
    %v1008 = vpop.f32.mrf.mxu0
    %1009 = vdwg.mxu0
    %v1010 = vadd.f32 %v808, %v1004
    %v1011 = vadd.f32 %v809, %v1007
    %1012 = vst.msk [vmem:[#allocation8] sm:$0xff] %vm59, %v1010
    %1013 = vst.msk [vmem:[#allocation8 + $0x8] sm:$0xff] %vm59, %v1011
    // Predicated region
    $region38: #{encoder_layer_fwd.1} parent=1 // pred_check
      _
    $region39: #{encoder_layer_fwd.1} parent=1 // pred_check_branch
      %1015 = sbr.rel (0) target = $region41
    $region40: #{encoder_layer_fwd.1} parent=1 // pred_region
      %s1017 = ssub.s32 256, 256
      %1018 = vsyncadd [#allocation5], %s1017
      %s1019 = sshll.u32 [#allocation8], 4
      %s1020 = int_to_ptr.vmem [resolvable:$true] %s1019
      %1025 = dma.vmem_to_hbm [thread:$0]  %s1020, 256, %s7, [#allocation5], 128, 128, 8
    $region41: #{encoder_layer_fwd.1} parent=1 // pred_fallthru
      _
    // Predicated region
    $region42: #{encoder_layer_fwd.1} parent=1 // pred_check
      _
    $region43: #{encoder_layer_fwd.1} parent=1 // pred_check_branch
      %1027 = sbr.rel (0) target = $region45
    $region44: #{encoder_layer_fwd.1} parent=1 // pred_region
      %1028 = dma.done [#allocation5], 256
    $region45: #{encoder_layer_fwd.1} parent=1 // pred_fallthru
      _
    %1029 = vsyncpa [#allocation4], 1
    %1030 = vsyncpa [#allocation7], 1
    %1031 = vsyncpa [#allocation5], 1

</llo_original>
